<compile_context>
chip_gen: v6e
topology: v6e:2x2x1
jax: 0.10.0
libtpu: 0.0.40
codegen_flags: <defaults>
</compile_context>

<pallas_src>
import functools

import jax
import jax.numpy as jnp
from jax.experimental import pallas as pl
from jax.experimental.pallas import tpu as pltpu

_LANES = 128
_SUBLANES = 8
# Combined (x + t) input bytes per grid step: 16 MiB => 8 MiB per f32 input
# block, 2 x 16 MiB double-buffered = 32 MiB of VMEM for inputs.
_TARGET_STEP_BYTES = 16 * 1024 * 1024


def _dice_kernel(x_ref, t_ref, out_ref, *, tile_rows, last_block,
                 valid_rows_last):
    i = pl.program_id(0)

    @pl.when(i == 0)
    def _init():
        out_ref[...] = jnp.zeros_like(out_ref)

    s = jax.nn.sigmoid(x_ref[...].astype(jnp.float32))
    t = t_ref[...].astype(jnp.float32)

    def _accumulate(inter, both):
        # (tile_rows, 128) -> (8, 128) with pure VPU adds; the single
        # cross-lane/sublane reduction happens once, in the wrapper.
        inter8 = jnp.sum(
            inter.reshape(tile_rows // _SUBLANES, _SUBLANES, _LANES), axis=0)
        both8 = jnp.sum(
            both.reshape(tile_rows // _SUBLANES, _SUBLANES, _LANES), axis=0)
        out_ref[0] += inter8
        out_ref[1] += both8

    if valid_rows_last == tile_rows:
        # Block shape divides the (aligned) array: no masking anywhere.
        _accumulate(s * t, s + t)
    else:
        # Fast unmasked path for every full block.
        @pl.when(i != last_block)
        def _full():
            _accumulate(s * t, s + t)

        # Masked path only for the single ragged last block (Pallas partial
        # last blocks read undefined rows into the VMEM buffer).
        @pl.when(i == last_block)
        def _tail():
            row = jax.lax.broadcasted_iota(jnp.int32, (tile_rows, _LANES), 0)
            mask = row < valid_rows_last
            _accumulate(jnp.where(mask, s * t, 0.0),
                        jnp.where(mask, s + t, 0.0))


def dice_loss(inputs, targets, smooth=1e-6, *,
              target_step_bytes=_TARGET_STEP_BYTES):
    """Pallas implementation of DiceLoss.forward (scalar float32 output)."""
    x = jnp.ravel(inputs)
    t = jnp.ravel(targets)
    n = x.shape[0]

    min_tile = _SUBLANES * _LANES  # 1024
    aligned_n = (n // min_tile) * min_tile

    inter = jnp.float32(0.0)
    total = jnp.float32(0.0)

    if aligned_n > 0:
        rows = aligned_n // _LANES                     # multiple of 8
        bytes_per_row = _LANES * (x.dtype.itemsize + t.dtype.itemsize)
        tile_rows = min(rows, max(_SUBLANES, target_step_bytes // bytes_per_row))
        tile_rows = (tile_rows // _SUBLANES) * _SUBLANES
        num_blocks = pl.cdiv(rows, tile_rows)
        valid_rows_last = rows - (num_blocks - 1) * tile_rows

        x2 = x[:aligned_n].reshape(rows, _LANES)
        t2 = t[:aligned_n].reshape(rows, _LANES)

        kernel = functools.partial(
            _dice_kernel,
            tile_rows=tile_rows,
            last_block=num_blocks - 1,
            valid_rows_last=valid_rows_last,
        )

        # Double-buffered input blocks + headroom for the output block and
        # internal scratch; worst case ~40 MiB (fits v7x's 64 MiB VMEM).
        vmem_limit = max(
            32 * 1024 * 1024,
            2 * tile_rows * _LANES * (x.dtype.itemsize + t.dtype.itemsize)
            + 8 * 1024 * 1024)

        partials = pl.pallas_call(
            kernel,
            out_shape=jax.ShapeDtypeStruct((2, _SUBLANES, _LANES), jnp.float32),
            grid_spec=pltpu.PrefetchScalarGridSpec(
                num_scalar_prefetch=0,
                grid=(num_blocks,),
                in_specs=[
                    pl.BlockSpec((tile_rows, _LANES), lambda i: (i, 0)),
                    pl.BlockSpec((tile_rows, _LANES), lambda i: (i, 0)),
                ],
                out_specs=pl.BlockSpec((2, _SUBLANES, _LANES),
                                       lambda i: (0, 0, 0)),
            ),
            compiler_params=pltpu.CompilerParams(
                dimension_semantics=("arbitrary",),
                vmem_limit_bytes=int(vmem_limit),
            ),
            cost_estimate=pl.CostEstimate(
                flops=5 * aligned_n,
                transcendentals=aligned_n,
                bytes_accessed=(x2.size * x2.dtype.itemsize
                                + t2.size * t2.dtype.itemsize
                                + 2 * _SUBLANES * _LANES * 4),
            ),
        )(x2, t2)

        inter = inter + jnp.sum(partials[0])
        total = total + jnp.sum(partials[1])

    if aligned_n < n:
        # <=1023-element ragged tail folded in with plain jnp
        # (no full-array pad/concatenate copy).
        xt = jax.nn.sigmoid(x[aligned_n:].astype(jnp.float32))
        tt = t[aligned_n:].astype(jnp.float32)
        inter = inter + jnp.sum(xt * tt)
        total = total + jnp.sum(xt) + jnp.sum(tt)

    dice = (2.0 * inter + smooth) / (total + smooth)
    return 1.0 - dice


def dice_loss_ref(inputs, targets, smooth=1e-6):
    s = jax.nn.sigmoid(inputs.astype(jnp.float32)).ravel()
    t = targets.astype(jnp.float32).ravel()
    inter = jnp.sum(s * t)
    dice = (2.0 * inter + smooth) / (jnp.sum(s) + jnp.sum(t) + smooth)
    return 1.0 - dice


if __name__ == "__main__":
    key = jax.random.PRNGKey(0)
    k1, k2, k3, k4, k5, k6 = jax.random.split(key, 6)

    # Main case: NCHW logits + binary targets, size a multiple of 1024.
    x = jax.random.normal(k1, (2, 4, 16, 16), dtype=jnp.float32)
    tg = (jax.random.uniform(k2, (2, 4, 16, 16)) > 0.5).astype(jnp.float32)
    loss = jax.block_until_ready(dice_loss(x, tg))
    ref = dice_loss_ref(x, tg)
    assert jnp.allclose(loss, ref, atol=1e-5, rtol=1e-5), (loss, ref)

    # Multi-block grid with a ragged last block (exercises the masked path).
    x2 = jax.random.normal(k3, (3, 4, 16, 16), dtype=jnp.float32)
    t2 = (jax.random.uniform(k4, (3, 4, 16, 16)) > 0.5).astype(jnp.float32)
    loss2 = jax.block_until_ready(
        dice_loss(x2, t2, target_step_bytes=16 * 1024))
    ref2 = dice_loss_ref(x2, t2)
    assert jnp.allclose(loss2, ref2, atol=1e-5, rtol=1e-5), (loss2, ref2)

    # Unaligned element count (exercises the jnp tail path).
    x3 = jax.random.normal(k5, (2, 5, 11, 13), dtype=jnp.float32)
    t3 = (jax.random.uniform(k6, (2, 5, 11, 13)) > 0.5).astype(jnp.float32)
    loss3 = jax.block_until_ready(dice_loss(x3, t3))
    ref3 = dice_loss_ref(x3, t3)
    assert jnp.allclose(loss3, ref3, atol=1e-5, rtol=1e-5), (loss3, ref3)

    print("KERNEL_OK")
</pallas_src>

<mosaic_0001>
module attributes {stable_mosaic.version = 11 : i64} {
  func.func @_dice_kernel(%arg0: i32, %arg1: memref<16x128xf32, #tpu.memory_space<vmem>>, %arg2: memref<16x128xf32, #tpu.memory_space<vmem>>, %arg3: memref<2x8x128xf32, #tpu.memory_space<vmem>>) attributes {dimension_semantics = [#tpu.dimension_semantics<arbitrary>], iteration_bounds = array<i64: 1>, scalar_prefetch = 0 : i64, scratch_operands = 0 : i64, tpu.core_type = #tpu.core_type<tc>, window_params = [{transform_indices = @transform_0, window_bounds = array<i64: 16, 128>}, {transform_indices = @transform_1, window_bounds = array<i64: 16, 128>}, {pipeline_mode = #tpu.pipeline_mode<synchronous>, transform_indices = @transform_2, window_bounds = array<i64: 2, 8, 128>}]} {
    %c0_i32 = arith.constant 0 : i32
    %0 = arith.cmpi eq, %arg0, %c0_i32 : i32
    %1 = arith.extui %0 : i1 to i32
    %c0_i32_0 = arith.constant 0 : i32
    %2 = arith.cmpi ne, %1, %c0_i32_0 : i32
    scf.if %2 {
      %cst_17 = arith.constant 0.000000e+00 : f32
      %28 = vector.broadcast %cst_17 : f32 to vector<2x8x128xf32>
      %c0_18 = arith.constant 0 : index
      %c0_19 = arith.constant 0 : index
      %c0_20 = arith.constant 0 : index
      %29 = vector.load %arg3[%c0_18, %c0_19, %c0_20] : memref<2x8x128xf32, #tpu.memory_space<vmem>>, vector<2x8x128xf32>
      tpu.vector_store %arg3[%c0_18, %c0_19, %c0_20], %28 {strides = array<i32>} : memref<2x8x128xf32, #tpu.memory_space<vmem>>, vector<2x8x128xf32>,
    } else {
    }
    %c0 = arith.constant 0 : index
    %c0_1 = arith.constant 0 : index
    %3 = vector.load %arg1[%c0, %c0_1] : memref<16x128xf32, #tpu.memory_space<vmem>>, vector<16x128xf32>
    %4 = arith.negf %3 : vector<16x128xf32>
    %5 = math.exp %4 : vector<16x128xf32>
    %cst = arith.constant 1.000000e+00 : f32
    %6 = vector.broadcast %cst : f32 to vector<16x128xf32>
    %7 = arith.addf %6, %5 : vector<16x128xf32>
    %8 = arith.divf %6, %7 : vector<16x128xf32>
    %c0_2 = arith.constant 0 : index
    %c0_3 = arith.constant 0 : index
    %9 = vector.load %arg2[%c0_2, %c0_3] : memref<16x128xf32, #tpu.memory_space<vmem>>, vector<16x128xf32>
    %10 = arith.mulf %8, %9 : vector<16x128xf32>
    %11 = arith.addf %8, %9 : vector<16x128xf32>
    %12 = vector.shape_cast %10 : vector<16x128xf32> to vector<2x8x128xf32>
    %cst_4 = arith.constant dense<0.000000e+00> : vector<8x128xf32>
    %13 = vector.multi_reduction <add>, %12, %cst_4 [0] : vector<2x8x128xf32> to vector<8x128xf32>
    %14 = vector.shape_cast %11 : vector<16x128xf32> to vector<2x8x128xf32>
    %cst_5 = arith.constant dense<0.000000e+00> : vector<8x128xf32>
    %15 = vector.multi_reduction <add>, %14, %cst_5 [0] : vector<2x8x128xf32> to vector<8x128xf32>
    %c0_6 = arith.constant 0 : index
    %c0_7 = arith.constant 0 : index
    %c0_8 = arith.constant 0 : index
    %16 = vector.load %arg3[%c0_6, %c0_7, %c0_8] : memref<2x8x128xf32, #tpu.memory_space<vmem>>, vector<1x8x128xf32>
    %17 = vector.shape_cast %16 : vector<1x8x128xf32> to vector<8x128xf32>
    %18 = arith.addf %17, %13 : vector<8x128xf32>
    %c0_9 = arith.constant 0 : index
    %c0_10 = arith.constant 0 : index
    %c0_11 = arith.constant 0 : index
    %19 = vector.load %arg3[%c0_9, %c0_10, %c0_11] : memref<2x8x128xf32, #tpu.memory_space<vmem>>, vector<1x8x128xf32>
    %20 = vector.shape_cast %19 : vector<1x8x128xf32> to vector<8x128xf32>
    %21 = vector.shape_cast %18 : vector<8x128xf32> to vector<1x8x128xf32>
    tpu.vector_store %arg3[%c0_9, %c0_10, %c0_11], %21 {strides = array<i32>} : memref<2x8x128xf32, #tpu.memory_space<vmem>>, vector<1x8x128xf32>,
    %c1 = arith.constant 1 : index
    %c0_12 = arith.constant 0 : index
    %c0_13 = arith.constant 0 : index
    %22 = vector.load %arg3[%c1, %c0_12, %c0_13] : memref<2x8x128xf32, #tpu.memory_space<vmem>>, vector<1x8x128xf32>
    %23 = vector.shape_cast %22 : vector<1x8x128xf32> to vector<8x128xf32>
    %24 = arith.addf %23, %15 : vector<8x128xf32>
    %c1_14 = arith.constant 1 : index
    %c0_15 = arith.constant 0 : index
    %c0_16 = arith.constant 0 : index
    %25 = vector.load %arg3[%c1_14, %c0_15, %c0_16] : memref<2x8x128xf32, #tpu.memory_space<vmem>>, vector<1x8x128xf32>
    %26 = vector.shape_cast %25 : vector<1x8x128xf32> to vector<8x128xf32>
    %27 = vector.shape_cast %24 : vector<8x128xf32> to vector<1x8x128xf32>
    tpu.vector_store %arg3[%c1_14, %c0_15, %c0_16], %27 {strides = array<i32>} : memref<2x8x128xf32, #tpu.memory_space<vmem>>, vector<1x8x128xf32>,
    return
  }
  func.func @transform_0(%arg0: i32) -> (i32, i32) {
    %c0_i32 = arith.constant 0 : i32
    %c0_i32_0 = arith.constant 0 : i32
    return %arg0, %c0_i32 : i32, i32
  }
  func.func @transform_1(%arg0: i32) -> (i32, i32) {
    %c0_i32 = arith.constant 0 : i32
    %c0_i32_0 = arith.constant 0 : i32
    return %arg0, %c0_i32 : i32, i32
  }
  func.func @transform_2(%arg0: i32) -> (i32, i32, i32) {
    %c0_i32 = arith.constant 0 : i32
    %c0_i32_0 = arith.constant 0 : i32
    %c0_i32_1 = arith.constant 0 : i32
    %c0_i32_2 = arith.constant 0 : i32
    return %c0_i32, %c0_i32_0, %c0_i32_1 : i32, i32, i32
  }
}

</mosaic_0001>

<llo_original>
// kernel: tpu_custom_call.1
$region0: #{tpu_custom_call.1}
  #allocation0 [shape = 'u32[]', space=smem, size = 0x4, offset = 0x4, fixed_abs, tag = 'smem constant byte address 0x4 - core index']
  #allocation1 [shape = 'u32[144,128]{1,0:T(1,128)}', space=vmem, size = 0x12000, scoped, tag = 'internal scratch']
  %s0 = inlined_call_operand.hbm [shape: f32[16,128], index: 0, kind: input, shape index: {}]
  %s1 = inlined_call_operand.hbm [shape: f32[16,128], index: 1, kind: input, shape index: {}]
  %s2 = inlined_call_operand.hbm [shape: f32[2,8,128], index: 2, kind: output, shape index: {}]
  %s3 = sld [smem:[#allocation0]]
  $region30: #{tpu_custom_call.1} parent=0
    _
  %s5 = ssub.s32 1, %s3
  %s6 = scalar_select 0, %s5, %s3
  $region1: #{tpu_custom_call.1} parent=0
    #allocation2 [shape = 'u8[8192]{0}', space=vmem, size = 0x2000, scoped, tag = 'input window, operand 0, single buffered']
    #allocation3 [shape = 's32[1]{0}', space=sflag, size = 0x4, scoped, tag = 'scoped memory for tpu_custom_call.1']
    #allocation4 [shape = 's32[1]{0}', space=sflag, size = 0x4, scoped, tag = 'scoped memory for tpu_custom_call.1']
    #allocation5 [shape = 'u8[8192]{0}', space=vmem, size = 0x2000, scoped, tag = 'input window, operand 1, single buffered']
    #allocation6 [shape = 's32[1]{0}', space=sflag, size = 0x4, scoped, tag = 'scoped memory for tpu_custom_call.1']
    #allocation7 [shape = 'u8[8192]{0}', space=vmem, size = 0x2000, scoped, tag = 'output window, operand 0, single buffered']
    %7 = vsyncpa [#allocation3], 0
    %8 = vsyncpa [#allocation6], 0
    %9 = vsyncpa [#allocation4], 0
    // Predicated region
    $region2: #{tpu_custom_call.1} parent=1 // pred_check
      _
    $region3: #{tpu_custom_call.1} parent=1 // pred_check_branch
      %11 = sbr.rel (0) target = $region5
    $region4: #{tpu_custom_call.1} parent=1 // pred_region
      %s13 = ssub.s32 256, 256
      %14 = vsyncadd [#allocation3], %s13
      %s15 = sshll.u32 [#allocation2], 4
      %s16 = int_to_ptr.vmem [resolvable:$true] %s15
      %21 = dma.hbm_to_vmem [thread:$0]  %s0, 256, %s16, [#allocation3], 128, 128, 8
    $region5: #{tpu_custom_call.1} parent=1 // pred_fallthru
      _
    // Predicated region
    $region6: #{tpu_custom_call.1} parent=1 // pred_check
      _
    $region7: #{tpu_custom_call.1} parent=1 // pred_check_branch
      %23 = sbr.rel (0) target = $region9
    $region8: #{tpu_custom_call.1} parent=1 // pred_region
      %s25 = ssub.s32 256, 256
      %26 = vsyncadd [#allocation6], %s25
      %s27 = sshll.u32 [#allocation5], 4
      %s28 = int_to_ptr.vmem [resolvable:$true] %s27
      %33 = dma.hbm_to_vmem [thread:$0]  %s1, 256, %s28, [#allocation6], 128, 128, 8
    $region9: #{tpu_custom_call.1} parent=1 // pred_fallthru
      _
    // Predicated region
    $region10: #{tpu_custom_call.1} parent=1 // pred_check
      _
    $region11: #{tpu_custom_call.1} parent=1 // pred_check_branch
      %35 = sbr.rel (0) target = $region13
    $region12: #{tpu_custom_call.1} parent=1 // pred_region
      %36 = dma.done [#allocation3], 256
    $region13: #{tpu_custom_call.1} parent=1 // pred_fallthru
      _
    // Predicated region
    $region14: #{tpu_custom_call.1} parent=1 // pred_check
      _
    $region15: #{tpu_custom_call.1} parent=1 // pred_check_branch
      %38 = sbr.rel (0) target = $region17
    $region16: #{tpu_custom_call.1} parent=1 // pred_region
      %39 = dma.done [#allocation6], 256
    $region17: #{tpu_custom_call.1} parent=1 // pred_fallthru
      _
    %p40 = scmp.eq.s32.totalorder 0, 0
    // Predicated region
    $region18: #{tpu_custom_call.1} parent=1 // pred_check
      %p41 = pneg %p40
    $region19: #{tpu_custom_call.1} parent=1 // pred_check_branch
      %43 = sbr.rel (%p41) target = $region21
    $region20: #{tpu_custom_call.1} parent=1 // pred_region
      %44 = vst [vmem:[#allocation7] sm:$0xff] 0.0
      %45 = vst [vmem:[#allocation7 + $0x8] sm:$0xff] 0.0
    $region21: #{tpu_custom_call.1} parent=1 // pred_fallthru
      _
    %v46 = vld [vmem:[#allocation2] sm:$0xff]
    %v47 = vld [vmem:[#allocation2 + $0x8] sm:$0xff]
    %v48 = vxor.u32 %v46, 2147483648
    %v49 = vxor.u32 %v47, 2147483648
    %v50 = vmul.f32 %v48, 1.442695
    %v51 = vpow.pop %v50
    %v52 = vmul.f32 %v49, 1.442695
    %v53 = vpow.pop %v52
    %v54 = vadd.f32 %v51, 1.0
    %v55 = vadd.f32 %v53, 1.0
    %v56 = vrcp.pop %v54
    %v57 = vmul.f32 1.0, %v56
    %v58 = vrcp.pop %v55
    %v59 = vmul.f32 1.0, %v58
    %v60 = vld [vmem:[#allocation5] sm:$0xff]
    %v61 = vld [vmem:[#allocation5 + $0x8] sm:$0xff]
    %v62 = vmul.f32 %v57, %v60
    %v63 = vmul.f32 %v59, %v61
    %v64 = vadd.f32 %v57, %v60
    %v65 = vadd.f32 %v59, %v61
    %v66 = vadd.f32 %v62, %v63
    %v67 = vadd.f32 %v64, %v65
    %v68 = vld [vmem:[#allocation7] sm:$0xff]
    %v69 = vadd.f32 %v68, %v66
    %70 = vst [vmem:[#allocation7] sm:$0xff] %v69
    %s71 = scalar_lea.vmem [#allocation7], 8
    %v72 = vld [vmem:[%s71] sm:$0xff]
    %v73 = vadd.f32 %v72, %v67
    %74 = vst [vmem:[%s71] sm:$0xff] %v73
    // Predicated region
    $region22: #{tpu_custom_call.1} parent=1 // pred_check
      _
    $region23: #{tpu_custom_call.1} parent=1 // pred_check_branch
      %76 = sbr.rel (0) target = $region25
    $region24: #{tpu_custom_call.1} parent=1 // pred_region
      %s78 = ssub.s32 256, 256
      %79 = vsyncadd [#allocation4], %s78
      %s80 = sshll.u32 [#allocation7], 4
      %s81 = int_to_ptr.vmem [resolvable:$true] %s80
      %86 = dma.vmem_to_hbm [thread:$0]  %s81, 256, %s2, [#allocation4], 128, 128, 8
    $region25: #{tpu_custom_call.1} parent=1 // pred_fallthru
      _
    // Predicated region
    $region26: #{tpu_custom_call.1} parent=1 // pred_check
      _
    $region27: #{tpu_custom_call.1} parent=1 // pred_check_branch
      %88 = sbr.rel (0) target = $region29
    $region28: #{tpu_custom_call.1} parent=1 // pred_region
      %89 = dma.done [#allocation4], 256
    $region29: #{tpu_custom_call.1} parent=1 // pred_fallthru
      _
    %90 = vsyncpa [#allocation3], 1
    %91 = vsyncpa [#allocation6], 1
    %92 = vsyncpa [#allocation4], 1

</llo_original>
